<compile_context>
chip_gen: v7x
topology: tpu7x:2x2x1
jax: 0.10.0
libtpu: 0.0.40
codegen_flags: <defaults>
</compile_context>

<pallas_src>
import functools

import jax
import jax.numpy as jnp
from jax.experimental import pallas as pl
from jax.experimental.pallas import tpu as pltpu


def _round_up(a, b):
    return ((a + b - 1) // b) * b


def _covariance_func_kernel(lhs_ref, rhs_ref, o_ref, *, n_kernels, exp_in_bf16):
    """One (TN, TM) output tile of sum_k exp(lhs @ rhs_k).

    All bias terms are pre-folded into the contraction, so each base kernel is
    one MXU matmul, one EUP exp, and an in-place accumulate into o_ref.
    """
    lhs = lhs_ref[...]                                         # (TN, Dp), shared by all k
    for k in range(n_kernels):                                 # static unroll; K is small
        t = jnp.dot(lhs, rhs_ref[k],                           # (TN, TM)  MXU
                    preferred_element_type=jnp.float32)
        if exp_in_bf16:
            e = jnp.exp(t.astype(jnp.bfloat16)).astype(jnp.float32)   # EUP bf16 (v6e/v7x)
        else:
            e = jnp.exp(t)                                      # EUP f32
        if k == 0:
            o_ref[...] = e                                      # no acc temp / final copy pass
        else:
            o_ref[...] += e


def _choose_tiles(n, m, tn, tm):
    # Cap tiles to the (padded) problem size; keep lane dim a multiple of 128
    # and sublane dim a multiple of 8 so output stores stay full-width.
    tn = max(8, min(tn, _round_up(max(n, 1), 8)))
    tm = max(128, min(tm, _round_up(max(m, 1), 128)))
    # If a *large* problem would otherwise be a single grid step, split the lane
    # axis so a dual-TensorCore chip (v7x) gets two parallel steps.  Small
    # problems keep one step (a forced split only adds ~0.35us/step overhead on
    # single-core v5e/v6e for zero benefit).
    if ((_round_up(n, tn) // tn) * (_round_up(m, tm) // tm) == 1
            and n * m * 4 > (4 << 20) and m > 128):
        tm = max(128, _round_up(-(-m // 2), 128))
    return tn, tm


def covariance_forward(x, xx, scales, signals, operation="func", *,
                       tn=256, tm=1024, use_bf16_exp=False):
    """Pallas equivalent of Covariance.forward for a stack of RBF base kernels."""
    if operation == "diag":
        # diag of a stationary RBF kernel is constant: +1 sign for 'func' * sum_k signal_k^2
        return jnp.full((x.shape[0],), jnp.sum(signals.astype(x.dtype) ** 2), dtype=x.dtype)
    if operation != "func":
        # TODO(synk): 'grad'/'leftgrad'/'rightgrad'/'gradgrad' derivative paths of the base kernels
        raise NotImplementedError(operation)

    n, d = x.shape
    m = xx.shape[0]
    k_kerns = scales.shape[0]

    xf = x.astype(jnp.float32)
    xxf = xx.astype(jnp.float32)
    inv2 = (1.0 / scales.astype(jnp.float32)) ** 2                   # (K, D) == 1 / scale^2
    sig2 = signals.astype(jnp.float32) ** 2                          # (K,)

    # Hoisted per-point terms (computed once in XLA, not per tile).
    xb = -0.5 * (xf * xf) @ inv2.T + jnp.log(sig2)[None, :]          # (N, K) row bias
    xxb = (-0.5 * (xxf * xxf) @ inv2.T).T                            # (K, M) col bias

    # Augmented contraction so the MXU produces cross + row_bias + col_bias directly.
    dp = _round_up(d + k_kerns + 1, 8)                               # pad to sublane multiple
    lhs = jnp.zeros((n, dp), jnp.float32)
    lhs = lhs.at[:, :d].set(xf)
    lhs = lhs.at[:, d:d + k_kerns].set(xb)
    lhs = lhs.at[:, d + k_kerns].set(1.0)

    rhs = jnp.zeros((k_kerns, dp, m), jnp.float32)
    rhs = rhs.at[:, :d, :].set(jnp.swapaxes(xxf[None, :, :] * inv2[:, None, :], 1, 2))
    rhs = rhs.at[:, d:d + k_kerns, :].set(
        jnp.broadcast_to(jnp.eye(k_kerns, dtype=jnp.float32)[:, :, None],
                         (k_kerns, k_kerns, m)))
    rhs = rhs.at[:, d + k_kerns, :].set(xxb)

    tn, tm = _choose_tiles(n, m, tn, tm)
    n_pad = _round_up(n, tn)
    m_pad = _round_up(m, tm)
    if n_pad != n:
        lhs = jnp.pad(lhs, ((0, n_pad - n), (0, 0)))
    if m_pad != m:
        rhs = jnp.pad(rhs, ((0, 0), (0, 0), (0, m_pad - m)))

    grid = (n_pad // tn, m_pad // tm)

    # Explicit VMEM budget: double-buffered I/O + a few tile-sized f32 live
    # temporaries, capped below per-TC physical capacity (v7x has only 64 MiB).
    tile_bytes = 4 * tn * tm
    needed = 2 * tile_bytes                                  # double-buffered output
    needed += 2 * 4 * (tn * dp + k_kerns * dp * tm)          # double-buffered inputs
    needed += 3 * tile_bytes                                  # live matmul/exp temporaries
    vmem_limit = max(needed + (4 << 20), 16 << 20)
    try:
        cap = pltpu.get_tpu_info().vmem_capacity_bytes
        vmem_limit = min(vmem_limit, max(cap - (16 << 20), 16 << 20))
    except Exception:
        vmem_limit = min(vmem_limit, 48 << 20)

    cost = pl.CostEstimate(
        flops=2 * n_pad * m_pad * k_kerns * dp,
        transcendentals=n_pad * m_pad * k_kerns,
        bytes_accessed=4 * (n_pad * m_pad + n_pad * dp + k_kerns * dp * m_pad),
    )

    kernel = functools.partial(_covariance_func_kernel, n_kernels=k_kerns,
                               exp_in_bf16=use_bf16_exp)
    out = pl.pallas_call(
        kernel,
        out_shape=jax.ShapeDtypeStruct((n_pad, m_pad), jnp.float32),
        grid=grid,
        in_specs=[
            pl.BlockSpec((tn, dp), lambda i, j: (i, 0)),              # augmented x rows
            pl.BlockSpec((k_kerns, dp, tm), lambda i, j: (0, 0, j)),  # augmented scaled xx^T
        ],
        out_specs=pl.BlockSpec((tn, tm), lambda i, j: (i, j)),
        compiler_params=pltpu.CompilerParams(
            dimension_semantics=("parallel", "parallel"),
            vmem_limit_bytes=int(vmem_limit)),
        cost_estimate=cost,
    )(lhs, rhs)

    if n_pad != n or m_pad != m:
        out = out[:n, :m]
    if out.dtype != x.dtype:
        out = out.astype(x.dtype)
    return out


def _reference_covariance(x, xx, scales, signals):
    r = (x[:, None, :] - xx[None, :, :])[None, ...] / scales[:, None, None, :]   # (K, N, M, D)
    k = (signals ** 2)[:, None, None] * jnp.exp(-0.5 * jnp.sum(r * r, axis=-1))  # (K, N, M)
    return jnp.sum(k, axis=0)


if __name__ == "__main__":
    key = jax.random.PRNGKey(0)
    kx, kxx, kx2, kxx2 = jax.random.split(key, 4)

    D, K = 8, 2
    # Deterministic per-kernel parameters (lengthscales per dim + signal amplitudes).
    scales = 0.5 + 0.1 * jnp.arange(K * D, dtype=jnp.float32).reshape(K, D)
    signals = jnp.array([1.0, 0.7], dtype=jnp.float32)

    # Case 1: tile-aligned shapes.
    N, M = 256, 256
    x = jax.random.normal(kx, (N, D), dtype=jnp.float32)
    xx = jax.random.normal(kxx, (M, D), dtype=jnp.float32)
    out = jax.block_until_ready(covariance_forward(x, xx, scales, signals, operation="func"))
    ref = _reference_covariance(x, xx, scales, signals)
    assert out.shape == (N, M)
    assert jnp.allclose(out, ref, atol=1e-4, rtol=1e-4)

    # Case 2: non-multiple shapes (exercises ceil-div grid + padding path).
    N2, M2 = 200, 300
    x2 = jax.random.normal(kx2, (N2, D), dtype=jnp.float32)
    xx2 = jax.random.normal(kxx2, (M2, D), dtype=jnp.float32)
    out2 = jax.block_until_ready(covariance_forward(x2, xx2, scales, signals, operation="func"))
    ref2 = _reference_covariance(x2, xx2, scales, signals)
    assert out2.shape == (N2, M2)
    assert jnp.allclose(out2, ref2, atol=1e-4, rtol=1e-4)

    # diag path
    dg = jax.block_until_ready(covariance_forward(x, None, scales, signals, operation="diag"))
    assert jnp.allclose(dg, jnp.full((N,), jnp.sum(signals ** 2)), atol=1e-6)

    print("KERNEL_OK")
</pallas_src>

<mosaic_0001>
module attributes {stable_mosaic.version = 11 : i64} {
  func.func @_covariance_func_kernel(%arg0: i32, %arg1: i32, %arg2: memref<256x16xf32, #tpu.memory_space<vmem>>, %arg3: memref<2x16x256xf32, #tpu.memory_space<vmem>>, %arg4: memref<256x256xf32, #tpu.memory_space<vmem>>) attributes {dimension_semantics = [#tpu.dimension_semantics<parallel>, #tpu.dimension_semantics<parallel>], iteration_bounds = array<i64: 1, 1>, scalar_prefetch = 0 : i64, scratch_operands = 0 : i64, tpu.core_type = #tpu.core_type<tc>, window_params = [{transform_indices = @transform_0, window_bounds = array<i64: 256, 16>}, {transform_indices = @transform_1, window_bounds = array<i64: 2, 16, 256>}, {transform_indices = @transform_2, window_bounds = array<i64: 256, 256>}]} {
    %c0 = arith.constant 0 : index
    %c0_0 = arith.constant 0 : index
    %0 = vector.load %arg2[%c0, %c0_0] : memref<256x16xf32, #tpu.memory_space<vmem>>, vector<256x16xf32>
    %c0_1 = arith.constant 0 : index
    %c0_2 = arith.constant 0 : index
    %c0_3 = arith.constant 0 : index
    %1 = vector.load %arg3[%c0_1, %c0_2, %c0_3] : memref<2x16x256xf32, #tpu.memory_space<vmem>>, vector<1x16x256xf32>
    %2 = vector.shape_cast %1 : vector<1x16x256xf32> to vector<16x256xf32>
    %cst = arith.constant dense<0.000000e+00> : vector<256x256xf32>
    %3 = tpu.matmul %0, %2, %cst {dimension_numbers = #tpu.dot_dimension_numbers<[1], [0], [0], [1], [0, 0, 1, 1], [], []>} : vector<256x16xf32>, vector<16x256xf32>, vector<256x256xf32> -> vector<256x256xf32>
    %4 = math.exp %3 : vector<256x256xf32>
    %c0_4 = arith.constant 0 : index
    %c0_5 = arith.constant 0 : index
    %5 = vector.load %arg4[%c0_4, %c0_5] : memref<256x256xf32, #tpu.memory_space<vmem>>, vector<256x256xf32>
    tpu.vector_store %arg4[%c0_4, %c0_5], %4 {strides = array<i32>} : memref<256x256xf32, #tpu.memory_space<vmem>>, vector<256x256xf32>,
    %c1 = arith.constant 1 : index
    %c0_6 = arith.constant 0 : index
    %c0_7 = arith.constant 0 : index
    %6 = vector.load %arg3[%c1, %c0_6, %c0_7] : memref<2x16x256xf32, #tpu.memory_space<vmem>>, vector<1x16x256xf32>
    %7 = vector.shape_cast %6 : vector<1x16x256xf32> to vector<16x256xf32>
    %cst_8 = arith.constant dense<0.000000e+00> : vector<256x256xf32>
    %8 = tpu.matmul %0, %7, %cst_8 {dimension_numbers = #tpu.dot_dimension_numbers<[1], [0], [0], [1], [0, 0, 1, 1], [], []>} : vector<256x16xf32>, vector<16x256xf32>, vector<256x256xf32> -> vector<256x256xf32>
    %9 = math.exp %8 : vector<256x256xf32>
    %c0_9 = arith.constant 0 : index
    %c0_10 = arith.constant 0 : index
    %10 = vector.load %arg4[%c0_9, %c0_10] : memref<256x256xf32, #tpu.memory_space<vmem>>, vector<256x256xf32>
    %11 = arith.addf %10, %9 : vector<256x256xf32>
    %c0_11 = arith.constant 0 : index
    %c0_12 = arith.constant 0 : index
    %12 = vector.load %arg4[%c0_11, %c0_12] : memref<256x256xf32, #tpu.memory_space<vmem>>, vector<256x256xf32>
    tpu.vector_store %arg4[%c0_11, %c0_12], %11 {strides = array<i32>} : memref<256x256xf32, #tpu.memory_space<vmem>>, vector<256x256xf32>,
    return
  }
  func.func @transform_0(%arg0: i32, %arg1: i32) -> (i32, i32) {
    %c0_i32 = arith.constant 0 : i32
    %c0_i32_0 = arith.constant 0 : i32
    return %arg0, %c0_i32 : i32, i32
  }
  func.func @transform_1(%arg0: i32, %arg1: i32) -> (i32, i32, i32) {
    %c0_i32 = arith.constant 0 : i32
    %c0_i32_0 = arith.constant 0 : i32
    %c0_i32_1 = arith.constant 0 : i32
    return %c0_i32, %c0_i32_0, %arg1 : i32, i32, i32
  }
  func.func @transform_2(%arg0: i32, %arg1: i32) -> (i32, i32) {
    %c0_i32 = arith.constant 0 : i32
    return %arg0, %arg1 : i32, i32
  }
}

</mosaic_0001>

<llo_original>
// kernel: tpu_custom_call.1
$region0: #{tpu_custom_call.1}
  #allocation0 [shape = 'u32[]', space=smem, size = 0x4, offset = 0x4, fixed_abs, tag = 'smem constant byte address 0x4 - core index']
  #allocation1 [shape = 'u32[144,128]{1,0:T(1,128)}', space=vmem, size = 0x12000, scoped, tag = 'internal scratch']
  %s0 = inlined_call_operand.vmem [shape: f32[256,16], index: 0, kind: input, shape index: {}]
  %s1 = inlined_call_operand.vmem [shape: f32[2,16,256], index: 1, kind: input, shape index: {}]
  %s2 = inlined_call_operand.hbm [shape: f32[256,256], index: 2, kind: output, shape index: {}]
  %s3 = sld [smem:[#allocation0]]
  $region18: #{tpu_custom_call.1} parent=0
    _
  %s5 = ssub.s32 1, %s3
  %s6 = scalar_select 0, %s5, %s3
  $region1: #{tpu_custom_call.1} parent=0
    #allocation2 [shape = 'u8[262144]{0}', space=vmem, size = 0x40000, scoped, tag = 'output window, operand 0, single buffered']
    #allocation3 [shape = 's32[1]{0}', space=sflag, size = 0x4, scoped, tag = 'scoped memory for tpu_custom_call.1']
    %7 = vsyncpa [#allocation3], 0
    // Predicated region
    $region2: #{tpu_custom_call.1} parent=1 // pred_check
      _
    $region3: #{tpu_custom_call.1} parent=1 // pred_check_branch
      %9 = sbr.rel (0) target = $region5
    $region4: #{tpu_custom_call.1} parent=1 // pred_region
      _
    $region5: #{tpu_custom_call.1} parent=1 // pred_fallthru
      _
    // Predicated region
    $region6: #{tpu_custom_call.1} parent=1 // pred_check
      _
    $region7: #{tpu_custom_call.1} parent=1 // pred_check_branch
      %11 = sbr.rel (0) target = $region9
    $region8: #{tpu_custom_call.1} parent=1 // pred_region
      _
    $region9: #{tpu_custom_call.1} parent=1 // pred_fallthru
      _
    %v12 = vld [vmem:[%s0] sm:$0xff]
    %v13 = vld [vmem:[%s0 + $0x8] sm:$0xff]
    %v14 = vld [vmem:[%s0 + $0x10] sm:$0xff]
    %v15 = vld [vmem:[%s0 + $0x18] sm:$0xff]
    %v16 = vld [vmem:[%s0 + $0x20] sm:$0xff]
    %v17 = vld [vmem:[%s0 + $0x28] sm:$0xff]
    %v18 = vld [vmem:[%s0 + $0x30] sm:$0xff]
    %v19 = vld [vmem:[%s0 + $0x38] sm:$0xff]
    %v20 = vld [vmem:[%s0 + $0x40] sm:$0xff]
    %v21 = vld [vmem:[%s0 + $0x48] sm:$0xff]
    %v22 = vld [vmem:[%s0 + $0x50] sm:$0xff]
    %v23 = vld [vmem:[%s0 + $0x58] sm:$0xff]
    %v24 = vld [vmem:[%s0 + $0x60] sm:$0xff]
    %v25 = vld [vmem:[%s0 + $0x68] sm:$0xff]
    %v26 = vld [vmem:[%s0 + $0x70] sm:$0xff]
    %v27 = vld [vmem:[%s0 + $0x78] sm:$0xff]
    %v28 = vld [vmem:[%s0 + $0x80] sm:$0xff]
    %v29 = vld [vmem:[%s0 + $0x88] sm:$0xff]
    %v30 = vld [vmem:[%s0 + $0x90] sm:$0xff]
    %v31 = vld [vmem:[%s0 + $0x98] sm:$0xff]
    %v32 = vld [vmem:[%s0 + $0xa0] sm:$0xff]
    %v33 = vld [vmem:[%s0 + $0xa8] sm:$0xff]
    %v34 = vld [vmem:[%s0 + $0xb0] sm:$0xff]
    %v35 = vld [vmem:[%s0 + $0xb8] sm:$0xff]
    %v36 = vld [vmem:[%s0 + $0xc0] sm:$0xff]
    %v37 = vld [vmem:[%s0 + $0xc8] sm:$0xff]
    %v38 = vld [vmem:[%s0 + $0xd0] sm:$0xff]
    %v39 = vld [vmem:[%s0 + $0xd8] sm:$0xff]
    %v40 = vld [vmem:[%s0 + $0xe0] sm:$0xff]
    %v41 = vld [vmem:[%s0 + $0xe8] sm:$0xff]
    %v42 = vld [vmem:[%s0 + $0xf0] sm:$0xff]
    %v43 = vld [vmem:[%s0 + $0xf8] sm:$0xff]
    %v44 = vld [vmem:[%s1] sm:$0xff]
    %v45 = vld [vmem:[%s1 + $0x8] sm:$0xff]
    %v46 = vld [vmem:[%s1 + $0x10] sm:$0xff]
    %v47 = vld [vmem:[%s1 + $0x18] sm:$0xff]
    %vm48 = vcmask 130048
    %v50 = vsel %vm48, %v12, 0
    %v53 = vsel %vm48, %v13, 0
    %v56 = vsel %vm48, %v14, 0
    %v59 = vsel %vm48, %v15, 0
    %v62 = vsel %vm48, %v16, 0
    %v65 = vsel %vm48, %v17, 0
    %v68 = vsel %vm48, %v18, 0
    %v71 = vsel %vm48, %v19, 0
    %v74 = vsel %vm48, %v20, 0
    %v77 = vsel %vm48, %v21, 0
    %v80 = vsel %vm48, %v22, 0
    %v83 = vsel %vm48, %v23, 0
    %v86 = vsel %vm48, %v24, 0
    %v89 = vsel %vm48, %v25, 0
    %v92 = vsel %vm48, %v26, 0
    %v95 = vsel %vm48, %v27, 0
    %v98 = vsel %vm48, %v28, 0
    %v101 = vsel %vm48, %v29, 0
    %v104 = vsel %vm48, %v30, 0
    %v107 = vsel %vm48, %v31, 0
    %v110 = vsel %vm48, %v32, 0
    %v113 = vsel %vm48, %v33, 0
    %v116 = vsel %vm48, %v34, 0
    %v119 = vsel %vm48, %v35, 0
    %v122 = vsel %vm48, %v36, 0
    %v125 = vsel %vm48, %v37, 0
    %v128 = vsel %vm48, %v38, 0
    %v131 = vsel %vm48, %v39, 0
    %v134 = vsel %vm48, %v40, 0
    %v137 = vsel %vm48, %v41, 0
    %v140 = vsel %vm48, %v42, 0
    %v143 = vsel %vm48, %v43, 0
    %145 = vmatprep.subr.mxu0 %v45
    %146 = vmatpush1.msra.mxu0 %v44
    %147 = vmatprep.subr.mxu0 %v47
    %148 = vmatpush1.msra.mxu0 %v46
    %149 = vmatprep.subr.mxu0 0.0
    %150 = vmatpush1.msra.mxu0 0.0
    %151 = vmatprep.subr.mxu0 0.0
    %152 = vmatpush1.msra.mxu0 0.0
    %153 = vmatprep.subr.mxu0 0.0
    %154 = vmatpush1.msra.mxu0 0.0
    %155 = vmatprep.subr.mxu0 0.0
    %156 = vmatpush1.msra.mxu0 0.0
    %157 = vmatprep.subr.mxu0 0.0
    %158 = vmatpush1.msra.mxu0 0.0
    %159 = vmatprep.subr.mxu0 0.0
    %160 = vmatpush1.msra.mxu0 0.0
    %161 = vmatprep.subr.mxu0 0.0
    %162 = vmatpush1.msra.mxu0 0.0
    %163 = vmatprep.subr.mxu0 0.0
    %164 = vmatpush1.msra.mxu0 0.0
    %165 = vmatprep.subr.mxu0 0.0
    %166 = vmatpush1.msra.mxu0 0.0
    %167 = vmatprep.subr.mxu0 0.0
    %168 = vmatpush1.msra.mxu0 0.0
    %169 = vmatprep.subr.mxu0 0.0
    %170 = vmatpush1.msra.mxu0 0.0
    %171 = vmatprep.subr.mxu0 0.0
    %172 = vmatpush1.msra.mxu0 0.0
    %173 = vmatprep.subr.mxu0 0.0
    %174 = vmatpush1.msra.mxu0 0.0
    %175 = vmatprep.subr.mxu0 0.0
    %176 = vmatpush1.msra.mxu0 0.0
    %177 = vmatprep.subr.mxu0 0.0
    %178 = vmatpush1.msra.mxu0 0.0
    %179 = vmatprep.subr.mxu0 0.0
    %180 = vmatpush1.msra.mxu0 0.0
    %181 = vmatprep.subr.mxu0 0.0
    %182 = vmatpush1.msra.mxu0 0.0
    %183 = vmatprep.subr.mxu0 0.0
    %184 = vmatpush1.msra.mxu0 0.0
    %185 = vmatprep.subr.mxu0 0.0
    %186 = vmatpush1.msra.mxu0 0.0
    %187 = vmatprep.subr.mxu0 0.0
    %188 = vmatpush1.msra.mxu0 0.0
    %189 = vmatprep.subr.mxu0 0.0
    %190 = vmatpush1.msra.mxu0 0.0
    %191 = vmatprep.subr.mxu0 0.0
    %192 = vmatpush1.msra.mxu0 0.0
    %193 = vmatprep.subr.mxu0 0.0
    %194 = vmatpush1.msra.mxu0 0.0
    %195 = vmatprep.subr.mxu0 0.0
    %196 = vmatpush1.msra.mxu0 0.0
    %197 = vmatprep.subr.mxu0 0.0
    %198 = vmatpush1.msra.mxu0 0.0
    %199 = vmatprep.subr.mxu0 0.0
    %200 = vmatpush1.msra.mxu0 0.0
    %201 = vmatprep.subr.mxu0 0.0
    %202 = vmatpush1.msra.mxu0 0.0
    %203 = vmatprep.subr.mxu0 0.0
    %204 = vmatpush1.msra.mxu0 0.0
    %205 = vmatprep.subr.mxu0 0.0
    %206 = vmatpush1.msra.mxu0 0.0
    %207 = vmatprep.subr.mxu0 0.0
    %208 = vmatpush1.msra.mxu0 0.0
    %209 = vmatprep.mubr.f32.mxu0 0.0
    %210 = vmatmul.mubr.f32.gmra.mrb[0].mxu0 %v50
    %v211 = vpop.f32.mrb[0].mxu0
    %v212 = vadd.f32 0.0, %v211
    %v213 = vpop.f32.mrb[0].mxu0
    %v214 = vadd.f32 0.0, %v213
    %215 = vmatprep.mubr.f32.mxu0 0.0
    %216 = vmatmul.mubr.f32.gmra.mrb[0].mxu0 %v53
    %v217 = vpop.f32.mrb[0].mxu0
    %v218 = vadd.f32 0.0, %v217
    %v219 = vpop.f32.mrb[0].mxu0
    %v220 = vadd.f32 0.0, %v219
    %221 = vmatprep.mubr.f32.mxu0 0.0
    %222 = vmatmul.mubr.f32.gmra.mrb[0].mxu0 %v56
    %v223 = vpop.f32.mrb[0].mxu0
    %v224 = vadd.f32 0.0, %v223
    %v225 = vpop.f32.mrb[0].mxu0
    %v226 = vadd.f32 0.0, %v225
    %227 = vmatprep.mubr.f32.mxu0 0.0
    %228 = vmatmul.mubr.f32.gmra.mrb[0].mxu0 %v59
    %v229 = vpop.f32.mrb[0].mxu0
    %v230 = vadd.f32 0.0, %v229
    %v231 = vpop.f32.mrb[0].mxu0
    %v232 = vadd.f32 0.0, %v231
    %233 = vmatprep.mubr.f32.mxu0 0.0
    %234 = vmatmul.mubr.f32.gmra.mrb[0].mxu0 %v62
    %v235 = vpop.f32.mrb[0].mxu0
    %v236 = vadd.f32 0.0, %v235
    %v237 = vpop.f32.mrb[0].mxu0
    %v238 = vadd.f32 0.0, %v237
    %239 = vmatprep.mubr.f32.mxu0 0.0
    %240 = vmatmul.mubr.f32.gmra.mrb[0].mxu0 %v65
    %v241 = vpop.f32.mrb[0].mxu0
    %v242 = vadd.f32 0.0, %v241
    %v243 = vpop.f32.mrb[0].mxu0
    %v244 = vadd.f32 0.0, %v243
    %245 = vmatprep.mubr.f32.mxu0 0.0
    %246 = vmatmul.mubr.f32.gmra.mrb[0].mxu0 %v68
    %v247 = vpop.f32.mrb[0].mxu0
    %v248 = vadd.f32 0.0, %v247
    %v249 = vpop.f32.mrb[0].mxu0
    %v250 = vadd.f32 0.0, %v249
    %251 = vmatprep.mubr.f32.mxu0 0.0
    %252 = vmatmul.mubr.f32.gmra.mrb[0].mxu0 %v71
    %v253 = vpop.f32.mrb[0].mxu0
    %v254 = vadd.f32 0.0, %v253
    %v255 = vpop.f32.mrb[0].mxu0
    %v256 = vadd.f32 0.0, %v255
    %257 = vmatprep.mubr.f32.mxu0 0.0
    %258 = vmatmul.mubr.f32.gmra.mrb[0].mxu0 %v74
    %v259 = vpop.f32.mrb[0].mxu0
    %v260 = vadd.f32 0.0, %v259
    %v261 = vpop.f32.mrb[0].mxu0
    %v262 = vadd.f32 0.0, %v261
    %263 = vmatprep.mubr.f32.mxu0 0.0
    %264 = vmatmul.mubr.f32.gmra.mrb[0].mxu0 %v77
    %v265 = vpop.f32.mrb[0].mxu0
    %v266 = vadd.f32 0.0, %v265
    %v267 = vpop.f32.mrb[0].mxu0
    %v268 = vadd.f32 0.0, %v267
    %269 = vmatprep.mubr.f32.mxu0 0.0
    %270 = vmatmul.mubr.f32.gmra.mrb[0].mxu0 %v80
    %v271 = vpop.f32.mrb[0].mxu0
    %v272 = vadd.f32 0.0, %v271
    %v273 = vpop.f32.mrb[0].mxu0
    %v274 = vadd.f32 0.0, %v273
    %275 = vmatprep.mubr.f32.mxu0 0.0
    %276 = vmatmul.mubr.f32.gmra.mrb[0].mxu0 %v83
    %v277 = vpop.f32.mrb[0].mxu0
    %v278 = vadd.f32 0.0, %v277
    %v279 = vpop.f32.mrb[0].mxu0
    %v280 = vadd.f32 0.0, %v279
    %281 = vmatprep.mubr.f32.mxu0 0.0
    %282 = vmatmul.mubr.f32.gmra.mrb[0].mxu0 %v86
    %v283 = vpop.f32.mrb[0].mxu0
    %v284 = vadd.f32 0.0, %v283
    %v285 = vpop.f32.mrb[0].mxu0
    %v286 = vadd.f32 0.0, %v285
    %287 = vmatprep.mubr.f32.mxu0 0.0
    %288 = vmatmul.mubr.f32.gmra.mrb[0].mxu0 %v89
    %v289 = vpop.f32.mrb[0].mxu0
    %v290 = vadd.f32 0.0, %v289
    %v291 = vpop.f32.mrb[0].mxu0
    %v292 = vadd.f32 0.0, %v291
    %293 = vmatprep.mubr.f32.mxu0 0.0
    %294 = vmatmul.mubr.f32.gmra.mrb[0].mxu0 %v92
    %v295 = vpop.f32.mrb[0].mxu0
    %v296 = vadd.f32 0.0, %v295
    %v297 = vpop.f32.mrb[0].mxu0
    %v298 = vadd.f32 0.0, %v297
    %299 = vmatprep.mubr.f32.mxu0 0.0
    %300 = vmatmul.mubr.f32.gmra.mrb[0].mxu0 %v95
    %v301 = vpop.f32.mrb[0].mxu0
    %v302 = vadd.f32 0.0, %v301
    %v303 = vpop.f32.mrb[0].mxu0
    %v304 = vadd.f32 0.0, %v303
    %305 = vmatprep.mubr.f32.mxu0 0.0
    %306 = vmatmul.mubr.f32.gmra.mrb[0].mxu0 %v98
    %v307 = vpop.f32.mrb[0].mxu0
    %v308 = vadd.f32 0.0, %v307
    %v309 = vpop.f32.mrb[0].mxu0
    %v310 = vadd.f32 0.0, %v309
    %311 = vmatprep.mubr.f32.mxu0 0.0
    %312 = vmatmul.mubr.f32.gmra.mrb[0].mxu0 %v101
    %v313 = vpop.f32.mrb[0].mxu0
    %v314 = vadd.f32 0.0, %v313
    %v315 = vpop.f32.mrb[0].mxu0
    %v316 = vadd.f32 0.0, %v315
    %317 = vmatprep.mubr.f32.mxu0 0.0
    %318 = vmatmul.mubr.f32.gmra.mrb[0].mxu0 %v104
    %v319 = vpop.f32.mrb[0].mxu0
    %v320 = vadd.f32 0.0, %v319
    %v321 = vpop.f32.mrb[0].mxu0
    %v322 = vadd.f32 0.0, %v321
    %323 = vmatprep.mubr.f32.mxu0 0.0
    %324 = vmatmul.mubr.f32.gmra.mrb[0].mxu0 %v107
    %v325 = vpop.f32.mrb[0].mxu0
    %v326 = vadd.f32 0.0, %v325
    %v327 = vpop.f32.mrb[0].mxu0
    %v328 = vadd.f32 0.0, %v327
    %329 = vmatprep.mubr.f32.mxu0 0.0
    %330 = vmatmul.mubr.f32.gmra.mrb[0].mxu0 %v110
    %v331 = vpop.f32.mrb[0].mxu0
    %v332 = vadd.f32 0.0, %v331
    %v333 = vpop.f32.mrb[0].mxu0
    %v334 = vadd.f32 0.0, %v333
    %335 = vmatprep.mubr.f32.mxu0 0.0
    %336 = vmatmul.mubr.f32.gmra.mrb[0].mxu0 %v113
    %v337 = vpop.f32.mrb[0].mxu0
    %v338 = vadd.f32 0.0, %v337
    %v339 = vpop.f32.mrb[0].mxu0
    %v340 = vadd.f32 0.0, %v339
    %341 = vmatprep.mubr.f32.mxu0 0.0
    %342 = vmatmul.mubr.f32.gmra.mrb[0].mxu0 %v116
    %v343 = vpop.f32.mrb[0].mxu0
    %v344 = vadd.f32 0.0, %v343
    %v345 = vpop.f32.mrb[0].mxu0
    %v346 = vadd.f32 0.0, %v345
    %347 = vmatprep.mubr.f32.mxu0 0.0
    %348 = vmatmul.mubr.f32.gmra.mrb[0].mxu0 %v119
    %v349 = vpop.f32.mrb[0].mxu0
    %v350 = vadd.f32 0.0, %v349
    %v351 = vpop.f32.mrb[0].mxu0
    %v352 = vadd.f32 0.0, %v351
    %353 = vmatprep.mubr.f32.mxu0 0.0
    %354 = vmatmul.mubr.f32.gmra.mrb[0].mxu0 %v122
    %v355 = vpop.f32.mrb[0].mxu0
    %v356 = vadd.f32 0.0, %v355
    %v357 = vpop.f32.mrb[0].mxu0
    %v358 = vadd.f32 0.0, %v357
    %359 = vmatprep.mubr.f32.mxu0 0.0
    %360 = vmatmul.mubr.f32.gmra.mrb[0].mxu0 %v125
    %v361 = vpop.f32.mrb[0].mxu0
    %v362 = vadd.f32 0.0, %v361
    %v363 = vpop.f32.mrb[0].mxu0
    %v364 = vadd.f32 0.0, %v363
    %365 = vmatprep.mubr.f32.mxu0 0.0
    %366 = vmatmul.mubr.f32.gmra.mrb[0].mxu0 %v128
    %v367 = vpop.f32.mrb[0].mxu0
    %v368 = vadd.f32 0.0, %v367
    %v369 = vpop.f32.mrb[0].mxu0
    %v370 = vadd.f32 0.0, %v369
    %371 = vmatprep.mubr.f32.mxu0 0.0
    %372 = vmatmul.mubr.f32.gmra.mrb[0].mxu0 %v131
    %v373 = vpop.f32.mrb[0].mxu0
    %v374 = vadd.f32 0.0, %v373
    %v375 = vpop.f32.mrb[0].mxu0
    %v376 = vadd.f32 0.0, %v375
    %377 = vmatprep.mubr.f32.mxu0 0.0
    %378 = vmatmul.mubr.f32.gmra.mrb[0].mxu0 %v134
    %v379 = vpop.f32.mrb[0].mxu0
    %v380 = vadd.f32 0.0, %v379
    %v381 = vpop.f32.mrb[0].mxu0
    %v382 = vadd.f32 0.0, %v381
    %383 = vmatprep.mubr.f32.mxu0 0.0
    %384 = vmatmul.mubr.f32.gmra.mrb[0].mxu0 %v137
    %v385 = vpop.f32.mrb[0].mxu0
    %v386 = vadd.f32 0.0, %v385
    %v387 = vpop.f32.mrb[0].mxu0
    %v388 = vadd.f32 0.0, %v387
    %389 = vmatprep.mubr.f32.mxu0 0.0
    %390 = vmatmul.mubr.f32.gmra.mrb[0].mxu0 %v140
    %v391 = vpop.f32.mrb[0].mxu0
    %v392 = vadd.f32 0.0, %v391
    %v393 = vpop.f32.mrb[0].mxu0
    %v394 = vadd.f32 0.0, %v393
    %395 = vmatprep.mubr.f32.mxu0 0.0
    %396 = vmatmul.mubr.f32.gmra.mrb[0].mxu0 %v143
    %v397 = vpop.f32.mrb[0].mxu0
    %v398 = vadd.f32 0.0, %v397
    %v399 = vpop.f32.mrb[0].mxu0
    %v400 = vadd.f32 0.0, %v399
    %401 = vdwg.mxu0
    %v402 = vmul.f32 %v212, 1.442695
    %v403 = vpow.pop %v402
    %v404 = vmul.f32 %v214, 1.442695
    %v405 = vpow.pop %v404
    %v406 = vmul.f32 %v218, 1.442695
    %v407 = vpow.pop %v406
    %v408 = vmul.f32 %v220, 1.442695
    %v409 = vpow.pop %v408
    %v410 = vmul.f32 %v224, 1.442695
    %v411 = vpow.pop %v410
    %v412 = vmul.f32 %v226, 1.442695
    %v413 = vpow.pop %v412
    %v414 = vmul.f32 %v230, 1.442695
    %v415 = vpow.pop %v414
    %v416 = vmul.f32 %v232, 1.442695
    %v417 = vpow.pop %v416
    %v418 = vmul.f32 %v236, 1.442695
    %v419 = vpow.pop %v418
    %v420 = vmul.f32 %v238, 1.442695
    %v421 = vpow.pop %v420
    %v422 = vmul.f32 %v242, 1.442695
    %v423 = vpow.pop %v422
    %v424 = vmul.f32 %v244, 1.442695
    %v425 = vpow.pop %v424
    %v426 = vmul.f32 %v248, 1.442695
    %v427 = vpow.pop %v426
    %v428 = vmul.f32 %v250, 1.442695
    %v429 = vpow.pop %v428
    %v430 = vmul.f32 %v254, 1.442695
    %v431 = vpow.pop %v430
    %v432 = vmul.f32 %v256, 1.442695
    %v433 = vpow.pop %v432
    %v434 = vmul.f32 %v260, 1.442695
    %v435 = vpow.pop %v434
    %v436 = vmul.f32 %v262, 1.442695
    %v437 = vpow.pop %v436
    %v438 = vmul.f32 %v266, 1.442695
    %v439 = vpow.pop %v438
    %v440 = vmul.f32 %v268, 1.442695
    %v441 = vpow.pop %v440
    %v442 = vmul.f32 %v272, 1.442695
    %v443 = vpow.pop %v442
    %v444 = vmul.f32 %v274, 1.442695
    %v445 = vpow.pop %v444
    %v446 = vmul.f32 %v278, 1.442695
    %v447 = vpow.pop %v446
    %v448 = vmul.f32 %v280, 1.442695
    %v449 = vpow.pop %v448
    %v450 = vmul.f32 %v284, 1.442695
    %v451 = vpow.pop %v450
    %v452 = vmul.f32 %v286, 1.442695
    %v453 = vpow.pop %v452
    %v454 = vmul.f32 %v290, 1.442695
    %v455 = vpow.pop %v454
    %v456 = vmul.f32 %v292, 1.442695
    %v457 = vpow.pop %v456
    %v458 = vmul.f32 %v296, 1.442695
    %v459 = vpow.pop %v458
    %v460 = vmul.f32 %v298, 1.442695
    %v461 = vpow.pop %v460
    %v462 = vmul.f32 %v302, 1.442695
    %v463 = vpow.pop %v462
    %v464 = vmul.f32 %v304, 1.442695
    %v465 = vpow.pop %v464
    %v466 = vmul.f32 %v308, 1.442695
    %v467 = vpow.pop %v466
    %v468 = vmul.f32 %v310, 1.442695
    %v469 = vpow.pop %v468
    %v470 = vmul.f32 %v314, 1.442695
    %v471 = vpow.pop %v470
    %v472 = vmul.f32 %v316, 1.442695
    %v473 = vpow.pop %v472
    %v474 = vmul.f32 %v320, 1.442695
    %v475 = vpow.pop %v474
    %v476 = vmul.f32 %v322, 1.442695
    %v477 = vpow.pop %v476
    %v478 = vmul.f32 %v326, 1.442695
    %v479 = vpow.pop %v478
    %v480 = vmul.f32 %v328, 1.442695
    %v481 = vpow.pop %v480
    %v482 = vmul.f32 %v332, 1.442695
    %v483 = vpow.pop %v482
    %v484 = vmul.f32 %v334, 1.442695
    %v485 = vpow.pop %v484
    %v486 = vmul.f32 %v338, 1.442695
    %v487 = vpow.pop %v486
    %v488 = vmul.f32 %v340, 1.442695
    %v489 = vpow.pop %v488
    %v490 = vmul.f32 %v344, 1.442695
    %v491 = vpow.pop %v490
    %v492 = vmul.f32 %v346, 1.442695
    %v493 = vpow.pop %v492
    %v494 = vmul.f32 %v350, 1.442695
    %v495 = vpow.pop %v494
    %v496 = vmul.f32 %v352, 1.442695
    %v497 = vpow.pop %v496
    %v498 = vmul.f32 %v356, 1.442695
    %v499 = vpow.pop %v498
    %v500 = vmul.f32 %v358, 1.442695
    %v501 = vpow.pop %v500
    %v502 = vmul.f32 %v362, 1.442695
    %v503 = vpow.pop %v502
    %v504 = vmul.f32 %v364, 1.442695
    %v505 = vpow.pop %v504
    %v506 = vmul.f32 %v368, 1.442695
    %v507 = vpow.pop %v506
    %v508 = vmul.f32 %v370, 1.442695
    %v509 = vpow.pop %v508
    %v510 = vmul.f32 %v374, 1.442695
    %v511 = vpow.pop %v510
    %v512 = vmul.f32 %v376, 1.442695
    %v513 = vpow.pop %v512
    %v514 = vmul.f32 %v380, 1.442695
    %v515 = vpow.pop %v514
    %v516 = vmul.f32 %v382, 1.442695
    %v517 = vpow.pop %v516
    %v518 = vmul.f32 %v386, 1.442695
    %v519 = vpow.pop %v518
    %v520 = vmul.f32 %v388, 1.442695
    %v521 = vpow.pop %v520
    %v522 = vmul.f32 %v392, 1.442695
    %v523 = vpow.pop %v522
    %v524 = vmul.f32 %v394, 1.442695
    %v525 = vpow.pop %v524
    %v526 = vmul.f32 %v398, 1.442695
    %v527 = vpow.pop %v526
    %v528 = vmul.f32 %v400, 1.442695
    %v529 = vpow.pop %v528
    %530 = vst [vmem:[#allocation2] sm:$0xff] %v403
    %531 = vst [vmem:[#allocation2 + $0x8] sm:$0xff] %v405
    %532 = vst [vmem:[#allocation2 + $0x10] sm:$0xff] %v407
    %533 = vst [vmem:[#allocation2 + $0x18] sm:$0xff] %v409
    %534 = vst [vmem:[#allocation2 + $0x20] sm:$0xff] %v411
    %535 = vst [vmem:[#allocation2 + $0x28] sm:$0xff] %v413
    %536 = vst [vmem:[#allocation2 + $0x30] sm:$0xff] %v415
    %537 = vst [vmem:[#allocation2 + $0x38] sm:$0xff] %v417
    %538 = vst [vmem:[#allocation2 + $0x40] sm:$0xff] %v419
    %539 = vst [vmem:[#allocation2 + $0x48] sm:$0xff] %v421
    %540 = vst [vmem:[#allocation2 + $0x50] sm:$0xff] %v423
    %541 = vst [vmem:[#allocation2 + $0x58] sm:$0xff] %v425
    %542 = vst [vmem:[#allocation2 + $0x60] sm:$0xff] %v427
    %543 = vst [vmem:[#allocation2 + $0x68] sm:$0xff] %v429
    %544 = vst [vmem:[#allocation2 + $0x70] sm:$0xff] %v431
    %545 = vst [vmem:[#allocation2 + $0x78] sm:$0xff] %v433
    %546 = vst [vmem:[#allocation2 + $0x80] sm:$0xff] %v435
    %547 = vst [vmem:[#allocation2 + $0x88] sm:$0xff] %v437
    %548 = vst [vmem:[#allocation2 + $0x90] sm:$0xff] %v439
    %549 = vst [vmem:[#allocation2 + $0x98] sm:$0xff] %v441
    %550 = vst [vmem:[#allocation2 + $0xa0] sm:$0xff] %v443
    %551 = vst [vmem:[#allocation2 + $0xa8] sm:$0xff] %v445
    %552 = vst [vmem:[#allocation2 + $0xb0] sm:$0xff] %v447
    %553 = vst [vmem:[#allocation2 + $0xb8] sm:$0xff] %v449
    %554 = vst [vmem:[#allocation2 + $0xc0] sm:$0xff] %v451
    %555 = vst [vmem:[#allocation2 + $0xc8] sm:$0xff] %v453
    %556 = vst [vmem:[#allocation2 + $0xd0] sm:$0xff] %v455
    %557 = vst [vmem:[#allocation2 + $0xd8] sm:$0xff] %v457
    %558 = vst [vmem:[#allocation2 + $0xe0] sm:$0xff] %v459
    %559 = vst [vmem:[#allocation2 + $0xe8] sm:$0xff] %v461
    %560 = vst [vmem:[#allocation2 + $0xf0] sm:$0xff] %v463
    %561 = vst [vmem:[#allocation2 + $0xf8] sm:$0xff] %v465
    %562 = vst [vmem:[#allocation2 + $0x100] sm:$0xff] %v467
    %563 = vst [vmem:[#allocation2 + $0x108] sm:$0xff] %v469
    %564 = vst [vmem:[#allocation2 + $0x110] sm:$0xff] %v471
    %565 = vst [vmem:[#allocation2 + $0x118] sm:$0xff] %v473
    %566 = vst [vmem:[#allocation2 + $0x120] sm:$0xff] %v475
    %567 = vst [vmem:[#allocation2 + $0x128] sm:$0xff] %v477
    %568 = vst [vmem:[#allocation2 + $0x130] sm:$0xff] %v479
    %569 = vst [vmem:[#allocation2 + $0x138] sm:$0xff] %v481
    %570 = vst [vmem:[#allocation2 + $0x140] sm:$0xff] %v483
    %571 = vst [vmem:[#allocation2 + $0x148] sm:$0xff] %v485
    %572 = vst [vmem:[#allocation2 + $0x150] sm:$0xff] %v487
    %573 = vst [vmem:[#allocation2 + $0x158] sm:$0xff] %v489
    %574 = vst [vmem:[#allocation2 + $0x160] sm:$0xff] %v491
    %575 = vst [vmem:[#allocation2 + $0x168] sm:$0xff] %v493
    %576 = vst [vmem:[#allocation2 + $0x170] sm:$0xff] %v495
    %577 = vst [vmem:[#allocation2 + $0x178] sm:$0xff] %v497
    %578 = vst [vmem:[#allocation2 + $0x180] sm:$0xff] %v499
    %579 = vst [vmem:[#allocation2 + $0x188] sm:$0xff] %v501
    %580 = vst [vmem:[#allocation2 + $0x190] sm:$0xff] %v503
    %581 = vst [vmem:[#allocation2 + $0x198] sm:$0xff] %v505
    %582 = vst [vmem:[#allocation2 + $0x1a0] sm:$0xff] %v507
    %583 = vst [vmem:[#allocation2 + $0x1a8] sm:$0xff] %v509
    %584 = vst [vmem:[#allocation2 + $0x1b0] sm:$0xff] %v511
    %585 = vst [vmem:[#allocation2 + $0x1b8] sm:$0xff] %v513
    %586 = vst [vmem:[#allocation2 + $0x1c0] sm:$0xff] %v515
    %587 = vst [vmem:[#allocation2 + $0x1c8] sm:$0xff] %v517
    %588 = vst [vmem:[#allocation2 + $0x1d0] sm:$0xff] %v519
    %589 = vst [vmem:[#allocation2 + $0x1d8] sm:$0xff] %v521
    %590 = vst [vmem:[#allocation2 + $0x1e0] sm:$0xff] %v523
    %591 = vst [vmem:[#allocation2 + $0x1e8] sm:$0xff] %v525
    %592 = vst [vmem:[#allocation2 + $0x1f0] sm:$0xff] %v527
    %593 = vst [vmem:[#allocation2 + $0x1f8] sm:$0xff] %v529
    %s594 = scalar_lea.vmem %s1, 32
    %v595 = vld [vmem:[%s594] sm:$0xff]
    %v596 = vld [vmem:[%s594 + $0x8] sm:$0xff]
    %v597 = vld [vmem:[%s594 + $0x10] sm:$0xff]
    %v598 = vld [vmem:[%s594 + $0x18] sm:$0xff]
    %599 = vmatprep.subr.mxu0 %v596
    %600 = vmatpush1.msra.mxu0 %v595
    %601 = vmatprep.subr.mxu0 %v598
    %602 = vmatpush1.msra.mxu0 %v597
    %603 = vmatprep.subr.mxu0 0.0
    %604 = vmatpush1.msra.mxu0 0.0
    %605 = vmatprep.subr.mxu0 0.0
    %606 = vmatpush1.msra.mxu0 0.0
    %607 = vmatprep.subr.mxu0 0.0
    %608 = vmatpush1.msra.mxu0 0.0
    %609 = vmatprep.subr.mxu0 0.0
    %610 = vmatpush1.msra.mxu0 0.0
    %611 = vmatprep.subr.mxu0 0.0
    %612 = vmatpush1.msra.mxu0 0.0
    %613 = vmatprep.subr.mxu0 0.0
    %614 = vmatpush1.msra.mxu0 0.0
    %615 = vmatprep.subr.mxu0 0.0
    %616 = vmatpush1.msra.mxu0 0.0
    %617 = vmatprep.subr.mxu0 0.0
    %618 = vmatpush1.msra.mxu0 0.0
    %619 = vmatprep.subr.mxu0 0.0
    %620 = vmatpush1.msra.mxu0 0.0
    %621 = vmatprep.subr.mxu0 0.0
    %622 = vmatpush1.msra.mxu0 0.0
    %623 = vmatprep.subr.mxu0 0.0
    %624 = vmatpush1.msra.mxu0 0.0
    %625 = vmatprep.subr.mxu0 0.0
    %626 = vmatpush1.msra.mxu0 0.0
    %627 = vmatprep.subr.mxu0 0.0
    %628 = vmatpush1.msra.mxu0 0.0
    %629 = vmatprep.subr.mxu0 0.0
    %630 = vmatpush1.msra.mxu0 0.0
    %631 = vmatprep.subr.mxu0 0.0
    %632 = vmatpush1.msra.mxu0 0.0
    %633 = vmatprep.subr.mxu0 0.0
    %634 = vmatpush1.msra.mxu0 0.0
    %635 = vmatprep.subr.mxu0 0.0
    %636 = vmatpush1.msra.mxu0 0.0
    %637 = vmatprep.subr.mxu0 0.0
    %638 = vmatpush1.msra.mxu0 0.0
    %639 = vmatprep.subr.mxu0 0.0
    %640 = vmatpush1.msra.mxu0 0.0
    %641 = vmatprep.subr.mxu0 0.0
    %642 = vmatpush1.msra.mxu0 0.0
    %643 = vmatprep.subr.mxu0 0.0
    %644 = vmatpush1.msra.mxu0 0.0
    %645 = vmatprep.subr.mxu0 0.0
    %646 = vmatpush1.msra.mxu0 0.0
    %647 = vmatprep.subr.mxu0 0.0
    %648 = vmatpush1.msra.mxu0 0.0
    %649 = vmatprep.subr.mxu0 0.0
    %650 = vmatpush1.msra.mxu0 0.0
    %651 = vmatprep.subr.mxu0 0.0
    %652 = vmatpush1.msra.mxu0 0.0
    %653 = vmatprep.subr.mxu0 0.0
    %654 = vmatpush1.msra.mxu0 0.0
    %655 = vmatprep.subr.mxu0 0.0
    %656 = vmatpush1.msra.mxu0 0.0
    %657 = vmatprep.subr.mxu0 0.0
    %658 = vmatpush1.msra.mxu0 0.0
    %659 = vmatprep.subr.mxu0 0.0
    %660 = vmatpush1.msra.mxu0 0.0
    %661 = vmatprep.subr.mxu0 0.0
    %662 = vmatpush1.msra.mxu0 0.0
    %663 = vmatprep.mubr.f32.mxu0 0.0
    %664 = vmatmul.mubr.f32.gmra.mrb[0].mxu0 %v50
    %v665 = vpop.f32.mrb[0].mxu0
    %v666 = vadd.f32 0.0, %v665
    %v667 = vpop.f32.mrb[0].mxu0
    %v668 = vadd.f32 0.0, %v667
    %669 = vmatprep.mubr.f32.mxu0 0.0
    %670 = vmatmul.mubr.f32.gmra.mrb[0].mxu0 %v53
    %v671 = vpop.f32.mrb[0].mxu0
    %v672 = vadd.f32 0.0, %v671
    %v673 = vpop.f32.mrb[0].mxu0
    %v674 = vadd.f32 0.0, %v673
    %675 = vmatprep.mubr.f32.mxu0 0.0
    %676 = vmatmul.mubr.f32.gmra.mrb[0].mxu0 %v56
    %v677 = vpop.f32.mrb[0].mxu0
    %v678 = vadd.f32 0.0, %v677
    %v679 = vpop.f32.mrb[0].mxu0
    %v680 = vadd.f32 0.0, %v679
    %681 = vmatprep.mubr.f32.mxu0 0.0
    %682 = vmatmul.mubr.f32.gmra.mrb[0].mxu0 %v59
    %v683 = vpop.f32.mrb[0].mxu0
    %v684 = vadd.f32 0.0, %v683
    %v685 = vpop.f32.mrb[0].mxu0
    %v686 = vadd.f32 0.0, %v685
    %687 = vmatprep.mubr.f32.mxu0 0.0
    %688 = vmatmul.mubr.f32.gmra.mrb[0].mxu0 %v62
    %v689 = vpop.f32.mrb[0].mxu0
    %v690 = vadd.f32 0.0, %v689
    %v691 = vpop.f32.mrb[0].mxu0
    %v692 = vadd.f32 0.0, %v691
    %693 = vmatprep.mubr.f32.mxu0 0.0
    %694 = vmatmul.mubr.f32.gmra.mrb[0].mxu0 %v65
    %v695 = vpop.f32.mrb[0].mxu0
    %v696 = vadd.f32 0.0, %v695
    %v697 = vpop.f32.mrb[0].mxu0
    %v698 = vadd.f32 0.0, %v697
    %699 = vmatprep.mubr.f32.mxu0 0.0
    %700 = vmatmul.mubr.f32.gmra.mrb[0].mxu0 %v68
    %v701 = vpop.f32.mrb[0].mxu0
    %v702 = vadd.f32 0.0, %v701
    %v703 = vpop.f32.mrb[0].mxu0
    %v704 = vadd.f32 0.0, %v703
    %705 = vmatprep.mubr.f32.mxu0 0.0
    %706 = vmatmul.mubr.f32.gmra.mrb[0].mxu0 %v71
    %v707 = vpop.f32.mrb[0].mxu0
    %v708 = vadd.f32 0.0, %v707
    %v709 = vpop.f32.mrb[0].mxu0
    %v710 = vadd.f32 0.0, %v709
    %711 = vmatprep.mubr.f32.mxu0 0.0
    %712 = vmatmul.mubr.f32.gmra.mrb[0].mxu0 %v74
    %v713 = vpop.f32.mrb[0].mxu0
    %v714 = vadd.f32 0.0, %v713
    %v715 = vpop.f32.mrb[0].mxu0
    %v716 = vadd.f32 0.0, %v715
    %717 = vmatprep.mubr.f32.mxu0 0.0
    %718 = vmatmul.mubr.f32.gmra.mrb[0].mxu0 %v77
    %v719 = vpop.f32.mrb[0].mxu0
    %v720 = vadd.f32 0.0, %v719
    %v721 = vpop.f32.mrb[0].mxu0
    %v722 = vadd.f32 0.0, %v721
    %723 = vmatprep.mubr.f32.mxu0 0.0
    %724 = vmatmul.mubr.f32.gmra.mrb[0].mxu0 %v80
    %v725 = vpop.f32.mrb[0].mxu0
    %v726 = vadd.f32 0.0, %v725
    %v727 = vpop.f32.mrb[0].mxu0
    %v728 = vadd.f32 0.0, %v727
    %729 = vmatprep.mubr.f32.mxu0 0.0
    %730 = vmatmul.mubr.f32.gmra.mrb[0].mxu0 %v83
    %v731 = vpop.f32.mrb[0].mxu0
    %v732 = vadd.f32 0.0, %v731
    %v733 = vpop.f32.mrb[0].mxu0
    %v734 = vadd.f32 0.0, %v733
    %735 = vmatprep.mubr.f32.mxu0 0.0
    %736 = vmatmul.mubr.f32.gmra.mrb[0].mxu0 %v86
    %v737 = vpop.f32.mrb[0].mxu0
    %v738 = vadd.f32 0.0, %v737
    %v739 = vpop.f32.mrb[0].mxu0
    %v740 = vadd.f32 0.0, %v739
    %741 = vmatprep.mubr.f32.mxu0 0.0
    %742 = vmatmul.mubr.f32.gmra.mrb[0].mxu0 %v89
    %v743 = vpop.f32.mrb[0].mxu0
    %v744 = vadd.f32 0.0, %v743
    %v745 = vpop.f32.mrb[0].mxu0
    %v746 = vadd.f32 0.0, %v745
    %747 = vmatprep.mubr.f32.mxu0 0.0
    %748 = vmatmul.mubr.f32.gmra.mrb[0].mxu0 %v92
    %v749 = vpop.f32.mrb[0].mxu0
    %v750 = vadd.f32 0.0, %v749
    %v751 = vpop.f32.mrb[0].mxu0
    %v752 = vadd.f32 0.0, %v751
    %753 = vmatprep.mubr.f32.mxu0 0.0
    %754 = vmatmul.mubr.f32.gmra.mrb[0].mxu0 %v95
    %v755 = vpop.f32.mrb[0].mxu0
    %v756 = vadd.f32 0.0, %v755
    %v757 = vpop.f32.mrb[0].mxu0
    %v758 = vadd.f32 0.0, %v757
    %759 = vmatprep.mubr.f32.mxu0 0.0
    %760 = vmatmul.mubr.f32.gmra.mrb[0].mxu0 %v98
    %v761 = vpop.f32.mrb[0].mxu0
    %v762 = vadd.f32 0.0, %v761
    %v763 = vpop.f32.mrb[0].mxu0
    %v764 = vadd.f32 0.0, %v763
    %765 = vmatprep.mubr.f32.mxu0 0.0
    %766 = vmatmul.mubr.f32.gmra.mrb[0].mxu0 %v101
    %v767 = vpop.f32.mrb[0].mxu0
    %v768 = vadd.f32 0.0, %v767
    %v769 = vpop.f32.mrb[0].mxu0
    %v770 = vadd.f32 0.0, %v769
    %771 = vmatprep.mubr.f32.mxu0 0.0
    %772 = vmatmul.mubr.f32.gmra.mrb[0].mxu0 %v104
    %v773 = vpop.f32.mrb[0].mxu0
    %v774 = vadd.f32 0.0, %v773
    %v775 = vpop.f32.mrb[0].mxu0
    %v776 = vadd.f32 0.0, %v775
    %777 = vmatprep.mubr.f32.mxu0 0.0
    %778 = vmatmul.mubr.f32.gmra.mrb[0].mxu0 %v107
    %v779 = vpop.f32.mrb[0].mxu0
    %v780 = vadd.f32 0.0, %v779
    %v781 = vpop.f32.mrb[0].mxu0
    %v782 = vadd.f32 0.0, %v781
    %783 = vmatprep.mubr.f32.mxu0 0.0
    %784 = vmatmul.mubr.f32.gmra.mrb[0].mxu0 %v110
    %v785 = vpop.f32.mrb[0].mxu0
    %v786 = vadd.f32 0.0, %v785
    %v787 = vpop.f32.mrb[0].mxu0
    %v788 = vadd.f32 0.0, %v787
    %789 = vmatprep.mubr.f32.mxu0 0.0
    %790 = vmatmul.mubr.f32.gmra.mrb[0].mxu0 %v113
    %v791 = vpop.f32.mrb[0].mxu0
    %v792 = vadd.f32 0.0, %v791
    %v793 = vpop.f32.mrb[0].mxu0
    %v794 = vadd.f32 0.0, %v793
    %795 = vmatprep.mubr.f32.mxu0 0.0
    %796 = vmatmul.mubr.f32.gmra.mrb[0].mxu0 %v116
    %v797 = vpop.f32.mrb[0].mxu0
    %v798 = vadd.f32 0.0, %v797
    %v799 = vpop.f32.mrb[0].mxu0
    %v800 = vadd.f32 0.0, %v799
    %801 = vmatprep.mubr.f32.mxu0 0.0
    %802 = vmatmul.mubr.f32.gmra.mrb[0].mxu0 %v119
    %v803 = vpop.f32.mrb[0].mxu0
    %v804 = vadd.f32 0.0, %v803
    %v805 = vpop.f32.mrb[0].mxu0
    %v806 = vadd.f32 0.0, %v805
    %807 = vmatprep.mubr.f32.mxu0 0.0
    %808 = vmatmul.mubr.f32.gmra.mrb[0].mxu0 %v122
    %v809 = vpop.f32.mrb[0].mxu0
    %v810 = vadd.f32 0.0, %v809
    %v811 = vpop.f32.mrb[0].mxu0
    %v812 = vadd.f32 0.0, %v811
    %813 = vmatprep.mubr.f32.mxu0 0.0
    %814 = vmatmul.mubr.f32.gmra.mrb[0].mxu0 %v125
    %v815 = vpop.f32.mrb[0].mxu0
    %v816 = vadd.f32 0.0, %v815
    %v817 = vpop.f32.mrb[0].mxu0
    %v818 = vadd.f32 0.0, %v817
    %819 = vmatprep.mubr.f32.mxu0 0.0
    %820 = vmatmul.mubr.f32.gmra.mrb[0].mxu0 %v128
    %v821 = vpop.f32.mrb[0].mxu0
    %v822 = vadd.f32 0.0, %v821
    %v823 = vpop.f32.mrb[0].mxu0
    %v824 = vadd.f32 0.0, %v823
    %825 = vmatprep.mubr.f32.mxu0 0.0
    %826 = vmatmul.mubr.f32.gmra.mrb[0].mxu0 %v131
    %v827 = vpop.f32.mrb[0].mxu0
    %v828 = vadd.f32 0.0, %v827
    %v829 = vpop.f32.mrb[0].mxu0
    %v830 = vadd.f32 0.0, %v829
    %831 = vmatprep.mubr.f32.mxu0 0.0
    %832 = vmatmul.mubr.f32.gmra.mrb[0].mxu0 %v134
    %v833 = vpop.f32.mrb[0].mxu0
    %v834 = vadd.f32 0.0, %v833
    %v835 = vpop.f32.mrb[0].mxu0
    %v836 = vadd.f32 0.0, %v835
    %837 = vmatprep.mubr.f32.mxu0 0.0
    %838 = vmatmul.mubr.f32.gmra.mrb[0].mxu0 %v137
    %v839 = vpop.f32.mrb[0].mxu0
    %v840 = vadd.f32 0.0, %v839
    %v841 = vpop.f32.mrb[0].mxu0
    %v842 = vadd.f32 0.0, %v841
    %843 = vmatprep.mubr.f32.mxu0 0.0
    %844 = vmatmul.mubr.f32.gmra.mrb[0].mxu0 %v140
    %v845 = vpop.f32.mrb[0].mxu0
    %v846 = vadd.f32 0.0, %v845
    %v847 = vpop.f32.mrb[0].mxu0
    %v848 = vadd.f32 0.0, %v847
    %849 = vmatprep.mubr.f32.mxu0 0.0
    %850 = vmatmul.mubr.f32.gmra.mrb[0].mxu0 %v143
    %v851 = vpop.f32.mrb[0].mxu0
    %v852 = vadd.f32 0.0, %v851
    %v853 = vpop.f32.mrb[0].mxu0
    %v854 = vadd.f32 0.0, %v853
    %855 = vdwg.mxu0
    %v856 = vmul.f32 %v666, 1.442695
    %v857 = vpow.pop %v856
    %v858 = vmul.f32 %v668, 1.442695
    %v859 = vpow.pop %v858
    %v860 = vmul.f32 %v672, 1.442695
    %v861 = vpow.pop %v860
    %v862 = vmul.f32 %v674, 1.442695
    %v863 = vpow.pop %v862
    %v864 = vmul.f32 %v678, 1.442695
    %v865 = vpow.pop %v864
    %v866 = vmul.f32 %v680, 1.442695
    %v867 = vpow.pop %v866
    %v868 = vmul.f32 %v684, 1.442695
    %v869 = vpow.pop %v868
    %v870 = vmul.f32 %v686, 1.442695
    %v871 = vpow.pop %v870
    %v872 = vmul.f32 %v690, 1.442695
    %v873 = vpow.pop %v872
    %v874 = vmul.f32 %v692, 1.442695
    %v875 = vpow.pop %v874
    %v876 = vmul.f32 %v696, 1.442695
    %v877 = vpow.pop %v876
    %v878 = vmul.f32 %v698, 1.442695
    %v879 = vpow.pop %v878
    %v880 = vmul.f32 %v702, 1.442695
    %v881 = vpow.pop %v880
    %v882 = vmul.f32 %v704, 1.442695
    %v883 = vpow.pop %v882
    %v884 = vmul.f32 %v708, 1.442695
    %v885 = vpow.pop %v884
    %v886 = vmul.f32 %v710, 1.442695
    %v887 = vpow.pop %v886
    %v888 = vmul.f32 %v714, 1.442695
    %v889 = vpow.pop %v888
    %v890 = vmul.f32 %v716, 1.442695
    %v891 = vpow.pop %v890
    %v892 = vmul.f32 %v720, 1.442695
    %v893 = vpow.pop %v892
    %v894 = vmul.f32 %v722, 1.442695
    %v895 = vpow.pop %v894
    %v896 = vmul.f32 %v726, 1.442695
    %v897 = vpow.pop %v896
    %v898 = vmul.f32 %v728, 1.442695
    %v899 = vpow.pop %v898
    %v900 = vmul.f32 %v732, 1.442695
    %v901 = vpow.pop %v900
    %v902 = vmul.f32 %v734, 1.442695
    %v903 = vpow.pop %v902
    %v904 = vmul.f32 %v738, 1.442695
    %v905 = vpow.pop %v904
    %v906 = vmul.f32 %v740, 1.442695
    %v907 = vpow.pop %v906
    %v908 = vmul.f32 %v744, 1.442695
    %v909 = vpow.pop %v908
    %v910 = vmul.f32 %v746, 1.442695
    %v911 = vpow.pop %v910
    %v912 = vmul.f32 %v750, 1.442695
    %v913 = vpow.pop %v912
    %v914 = vmul.f32 %v752, 1.442695
    %v915 = vpow.pop %v914
    %v916 = vmul.f32 %v756, 1.442695
    %v917 = vpow.pop %v916
    %v918 = vmul.f32 %v758, 1.442695
    %v919 = vpow.pop %v918
    %v920 = vmul.f32 %v762, 1.442695
    %v921 = vpow.pop %v920
    %v922 = vmul.f32 %v764, 1.442695
    %v923 = vpow.pop %v922
    %v924 = vmul.f32 %v768, 1.442695
    %v925 = vpow.pop %v924
    %v926 = vmul.f32 %v770, 1.442695
    %v927 = vpow.pop %v926
    %v928 = vmul.f32 %v774, 1.442695
    %v929 = vpow.pop %v928
    %v930 = vmul.f32 %v776, 1.442695
    %v931 = vpow.pop %v930
    %v932 = vmul.f32 %v780, 1.442695
    %v933 = vpow.pop %v932
    %v934 = vmul.f32 %v782, 1.442695
    %v935 = vpow.pop %v934
    %v936 = vmul.f32 %v786, 1.442695
    %v937 = vpow.pop %v936
    %v938 = vmul.f32 %v788, 1.442695
    %v939 = vpow.pop %v938
    %v940 = vmul.f32 %v792, 1.442695
    %v941 = vpow.pop %v940
    %v942 = vmul.f32 %v794, 1.442695
    %v943 = vpow.pop %v942
    %v944 = vmul.f32 %v798, 1.442695
    %v945 = vpow.pop %v944
    %v946 = vmul.f32 %v800, 1.442695
    %v947 = vpow.pop %v946
    %v948 = vmul.f32 %v804, 1.442695
    %v949 = vpow.pop %v948
    %v950 = vmul.f32 %v806, 1.442695
    %v951 = vpow.pop %v950
    %v952 = vmul.f32 %v810, 1.442695
    %v953 = vpow.pop %v952
    %v954 = vmul.f32 %v812, 1.442695
    %v955 = vpow.pop %v954
    %v956 = vmul.f32 %v816, 1.442695
    %v957 = vpow.pop %v956
    %v958 = vmul.f32 %v818, 1.442695
    %v959 = vpow.pop %v958
    %v960 = vmul.f32 %v822, 1.442695
    %v961 = vpow.pop %v960
    %v962 = vmul.f32 %v824, 1.442695
    %v963 = vpow.pop %v962
    %v964 = vmul.f32 %v828, 1.442695
    %v965 = vpow.pop %v964
    %v966 = vmul.f32 %v830, 1.442695
    %v967 = vpow.pop %v966
    %v968 = vmul.f32 %v834, 1.442695
    %v969 = vpow.pop %v968
    %v970 = vmul.f32 %v836, 1.442695
    %v971 = vpow.pop %v970
    %v972 = vmul.f32 %v840, 1.442695
    %v973 = vpow.pop %v972
    %v974 = vmul.f32 %v842, 1.442695
    %v975 = vpow.pop %v974
    %v976 = vmul.f32 %v846, 1.442695
    %v977 = vpow.pop %v976
    %v978 = vmul.f32 %v848, 1.442695
    %v979 = vpow.pop %v978
    %v980 = vmul.f32 %v852, 1.442695
    %v981 = vpow.pop %v980
    %v982 = vmul.f32 %v854, 1.442695
    %v983 = vpow.pop %v982
    %v984 = vld [vmem:[#allocation2] sm:$0xff]
    %v985 = vld [vmem:[#allocation2 + $0x8] sm:$0xff]
    %v986 = vld [vmem:[#allocation2 + $0x10] sm:$0xff]
    %v987 = vld [vmem:[#allocation2 + $0x18] sm:$0xff]
    %v988 = vld [vmem:[#allocation2 + $0x20] sm:$0xff]
    %v989 = vld [vmem:[#allocation2 + $0x28] sm:$0xff]
    %v990 = vld [vmem:[#allocation2 + $0x30] sm:$0xff]
    %v991 = vld [vmem:[#allocation2 + $0x38] sm:$0xff]
    %v992 = vld [vmem:[#allocation2 + $0x40] sm:$0xff]
    %v993 = vld [vmem:[#allocation2 + $0x48] sm:$0xff]
    %v994 = vld [vmem:[#allocation2 + $0x50] sm:$0xff]
    %v995 = vld [vmem:[#allocation2 + $0x58] sm:$0xff]
    %v996 = vld [vmem:[#allocation2 + $0x60] sm:$0xff]
    %v997 = vld [vmem:[#allocation2 + $0x68] sm:$0xff]
    %v998 = vld [vmem:[#allocation2 + $0x70] sm:$0xff]
    %v999 = vld [vmem:[#allocation2 + $0x78] sm:$0xff]
    %v1000 = vld [vmem:[#allocation2 + $0x80] sm:$0xff]
    %v1001 = vld [vmem:[#allocation2 + $0x88] sm:$0xff]
    %v1002 = vld [vmem:[#allocation2 + $0x90] sm:$0xff]
    %v1003 = vld [vmem:[#allocation2 + $0x98] sm:$0xff]
    %v1004 = vld [vmem:[#allocation2 + $0xa0] sm:$0xff]
    %v1005 = vld [vmem:[#allocation2 + $0xa8] sm:$0xff]
    %v1006 = vld [vmem:[#allocation2 + $0xb0] sm:$0xff]
    %v1007 = vld [vmem:[#allocation2 + $0xb8] sm:$0xff]
    %v1008 = vld [vmem:[#allocation2 + $0xc0] sm:$0xff]
    %v1009 = vld [vmem:[#allocation2 + $0xc8] sm:$0xff]
    %v1010 = vld [vmem:[#allocation2 + $0xd0] sm:$0xff]
    %v1011 = vld [vmem:[#allocation2 + $0xd8] sm:$0xff]
    %v1012 = vld [vmem:[#allocation2 + $0xe0] sm:$0xff]
    %v1013 = vld [vmem:[#allocation2 + $0xe8] sm:$0xff]
    %v1014 = vld [vmem:[#allocation2 + $0xf0] sm:$0xff]
    %v1015 = vld [vmem:[#allocation2 + $0xf8] sm:$0xff]
    %v1016 = vld [vmem:[#allocation2 + $0x100] sm:$0xff]
    %v1017 = vld [vmem:[#allocation2 + $0x108] sm:$0xff]
    %v1018 = vld [vmem:[#allocation2 + $0x110] sm:$0xff]
    %v1019 = vld [vmem:[#allocation2 + $0x118] sm:$0xff]
    %v1020 = vld [vmem:[#allocation2 + $0x120] sm:$0xff]
    %v1021 = vld [vmem:[#allocation2 + $0x128] sm:$0xff]
    %v1022 = vld [vmem:[#allocation2 + $0x130] sm:$0xff]
    %v1023 = vld [vmem:[#allocation2 + $0x138] sm:$0xff]
    %v1024 = vld [vmem:[#allocation2 + $0x140] sm:$0xff]
    %v1025 = vld [vmem:[#allocation2 + $0x148] sm:$0xff]
    %v1026 = vld [vmem:[#allocation2 + $0x150] sm:$0xff]
    %v1027 = vld [vmem:[#allocation2 + $0x158] sm:$0xff]
    %v1028 = vld [vmem:[#allocation2 + $0x160] sm:$0xff]
    %v1029 = vld [vmem:[#allocation2 + $0x168] sm:$0xff]
    %v1030 = vld [vmem:[#allocation2 + $0x170] sm:$0xff]
    %v1031 = vld [vmem:[#allocation2 + $0x178] sm:$0xff]
    %v1032 = vld [vmem:[#allocation2 + $0x180] sm:$0xff]
    %v1033 = vld [vmem:[#allocation2 + $0x188] sm:$0xff]
    %v1034 = vld [vmem:[#allocation2 + $0x190] sm:$0xff]
    %v1035 = vld [vmem:[#allocation2 + $0x198] sm:$0xff]
    %v1036 = vld [vmem:[#allocation2 + $0x1a0] sm:$0xff]
    %v1037 = vld [vmem:[#allocation2 + $0x1a8] sm:$0xff]
    %v1038 = vld [vmem:[#allocation2 + $0x1b0] sm:$0xff]
    %v1039 = vld [vmem:[#allocation2 + $0x1b8] sm:$0xff]
    %v1040 = vld [vmem:[#allocation2 + $0x1c0] sm:$0xff]
    %v1041 = vld [vmem:[#allocation2 + $0x1c8] sm:$0xff]
    %v1042 = vld [vmem:[#allocation2 + $0x1d0] sm:$0xff]
    %v1043 = vld [vmem:[#allocation2 + $0x1d8] sm:$0xff]
    %v1044 = vld [vmem:[#allocation2 + $0x1e0] sm:$0xff]
    %v1045 = vld [vmem:[#allocation2 + $0x1e8] sm:$0xff]
    %v1046 = vld [vmem:[#allocation2 + $0x1f0] sm:$0xff]
    %v1047 = vld [vmem:[#allocation2 + $0x1f8] sm:$0xff]
    %v1048 = vadd.f32 %v984, %v857
    %v1049 = vadd.f32 %v985, %v859
    %v1050 = vadd.f32 %v986, %v861
    %v1051 = vadd.f32 %v987, %v863
    %v1052 = vadd.f32 %v988, %v865
    %v1053 = vadd.f32 %v989, %v867
    %v1054 = vadd.f32 %v990, %v869
    %v1055 = vadd.f32 %v991, %v871
    %v1056 = vadd.f32 %v992, %v873
    %v1057 = vadd.f32 %v993, %v875
    %v1058 = vadd.f32 %v994, %v877
    %v1059 = vadd.f32 %v995, %v879
    %v1060 = vadd.f32 %v996, %v881
    %v1061 = vadd.f32 %v997, %v883
    %v1062 = vadd.f32 %v998, %v885
    %v1063 = vadd.f32 %v999, %v887
    %v1064 = vadd.f32 %v1000, %v889
    %v1065 = vadd.f32 %v1001, %v891
    %v1066 = vadd.f32 %v1002, %v893
    %v1067 = vadd.f32 %v1003, %v895
    %v1068 = vadd.f32 %v1004, %v897
    %v1069 = vadd.f32 %v1005, %v899
    %v1070 = vadd.f32 %v1006, %v901
    %v1071 = vadd.f32 %v1007, %v903
    %v1072 = vadd.f32 %v1008, %v905
    %v1073 = vadd.f32 %v1009, %v907
    %v1074 = vadd.f32 %v1010, %v909
    %v1075 = vadd.f32 %v1011, %v911
    %v1076 = vadd.f32 %v1012, %v913
    %v1077 = vadd.f32 %v1013, %v915
    %v1078 = vadd.f32 %v1014, %v917
    %v1079 = vadd.f32 %v1015, %v919
    %v1080 = vadd.f32 %v1016, %v921
    %v1081 = vadd.f32 %v1017, %v923
    %v1082 = vadd.f32 %v1018, %v925
    %v1083 = vadd.f32 %v1019, %v927
    %v1084 = vadd.f32 %v1020, %v929
    %v1085 = vadd.f32 %v1021, %v931
    %v1086 = vadd.f32 %v1022, %v933
    %v1087 = vadd.f32 %v1023, %v935
    %v1088 = vadd.f32 %v1024, %v937
    %v1089 = vadd.f32 %v1025, %v939
    %v1090 = vadd.f32 %v1026, %v941
    %v1091 = vadd.f32 %v1027, %v943
    %v1092 = vadd.f32 %v1028, %v945
    %v1093 = vadd.f32 %v1029, %v947
    %v1094 = vadd.f32 %v1030, %v949
    %v1095 = vadd.f32 %v1031, %v951
    %v1096 = vadd.f32 %v1032, %v953
    %v1097 = vadd.f32 %v1033, %v955
    %v1098 = vadd.f32 %v1034, %v957
    %v1099 = vadd.f32 %v1035, %v959
    %v1100 = vadd.f32 %v1036, %v961
    %v1101 = vadd.f32 %v1037, %v963
    %v1102 = vadd.f32 %v1038, %v965
    %v1103 = vadd.f32 %v1039, %v967
    %v1104 = vadd.f32 %v1040, %v969
    %v1105 = vadd.f32 %v1041, %v971
    %v1106 = vadd.f32 %v1042, %v973
    %v1107 = vadd.f32 %v1043, %v975
    %v1108 = vadd.f32 %v1044, %v977
    %v1109 = vadd.f32 %v1045, %v979
    %v1110 = vadd.f32 %v1046, %v981
    %v1111 = vadd.f32 %v1047, %v983
    %1112 = vst [vmem:[#allocation2] sm:$0xff] %v1048
    %1113 = vst [vmem:[#allocation2 + $0x8] sm:$0xff] %v1049
    %1114 = vst [vmem:[#allocation2 + $0x10] sm:$0xff] %v1050
    %1115 = vst [vmem:[#allocation2 + $0x18] sm:$0xff] %v1051
    %1116 = vst [vmem:[#allocation2 + $0x20] sm:$0xff] %v1052
    %1117 = vst [vmem:[#allocation2 + $0x28] sm:$0xff] %v1053
    %1118 = vst [vmem:[#allocation2 + $0x30] sm:$0xff] %v1054
    %1119 = vst [vmem:[#allocation2 + $0x38] sm:$0xff] %v1055
    %1120 = vst [vmem:[#allocation2 + $0x40] sm:$0xff] %v1056
    %1121 = vst [vmem:[#allocation2 + $0x48] sm:$0xff] %v1057
    %1122 = vst [vmem:[#allocation2 + $0x50] sm:$0xff] %v1058
    %1123 = vst [vmem:[#allocation2 + $0x58] sm:$0xff] %v1059
    %1124 = vst [vmem:[#allocation2 + $0x60] sm:$0xff] %v1060
    %1125 = vst [vmem:[#allocation2 + $0x68] sm:$0xff] %v1061
    %1126 = vst [vmem:[#allocation2 + $0x70] sm:$0xff] %v1062
    %1127 = vst [vmem:[#allocation2 + $0x78] sm:$0xff] %v1063
    %1128 = vst [vmem:[#allocation2 + $0x80] sm:$0xff] %v1064
    %1129 = vst [vmem:[#allocation2 + $0x88] sm:$0xff] %v1065
    %1130 = vst [vmem:[#allocation2 + $0x90] sm:$0xff] %v1066
    %1131 = vst [vmem:[#allocation2 + $0x98] sm:$0xff] %v1067
    %1132 = vst [vmem:[#allocation2 + $0xa0] sm:$0xff] %v1068
    %1133 = vst [vmem:[#allocation2 + $0xa8] sm:$0xff] %v1069
    %1134 = vst [vmem:[#allocation2 + $0xb0] sm:$0xff] %v1070
    %1135 = vst [vmem:[#allocation2 + $0xb8] sm:$0xff] %v1071
    %1136 = vst [vmem:[#allocation2 + $0xc0] sm:$0xff] %v1072
    %1137 = vst [vmem:[#allocation2 + $0xc8] sm:$0xff] %v1073
    %1138 = vst [vmem:[#allocation2 + $0xd0] sm:$0xff] %v1074
    %1139 = vst [vmem:[#allocation2 + $0xd8] sm:$0xff] %v1075
    %1140 = vst [vmem:[#allocation2 + $0xe0] sm:$0xff] %v1076
    %1141 = vst [vmem:[#allocation2 + $0xe8] sm:$0xff] %v1077
    %1142 = vst [vmem:[#allocation2 + $0xf0] sm:$0xff] %v1078
    %1143 = vst [vmem:[#allocation2 + $0xf8] sm:$0xff] %v1079
    %1144 = vst [vmem:[#allocation2 + $0x100] sm:$0xff] %v1080
    %1145 = vst [vmem:[#allocation2 + $0x108] sm:$0xff] %v1081
    %1146 = vst [vmem:[#allocation2 + $0x110] sm:$0xff] %v1082
    %1147 = vst [vmem:[#allocation2 + $0x118] sm:$0xff] %v1083
    %1148 = vst [vmem:[#allocation2 + $0x120] sm:$0xff] %v1084
    %1149 = vst [vmem:[#allocation2 + $0x128] sm:$0xff] %v1085
    %1150 = vst [vmem:[#allocation2 + $0x130] sm:$0xff] %v1086
    %1151 = vst [vmem:[#allocation2 + $0x138] sm:$0xff] %v1087
    %1152 = vst [vmem:[#allocation2 + $0x140] sm:$0xff] %v1088
    %1153 = vst [vmem:[#allocation2 + $0x148] sm:$0xff] %v1089
    %1154 = vst [vmem:[#allocation2 + $0x150] sm:$0xff] %v1090
    %1155 = vst [vmem:[#allocation2 + $0x158] sm:$0xff] %v1091
    %1156 = vst [vmem:[#allocation2 + $0x160] sm:$0xff] %v1092
    %1157 = vst [vmem:[#allocation2 + $0x168] sm:$0xff] %v1093
    %1158 = vst [vmem:[#allocation2 + $0x170] sm:$0xff] %v1094
    %1159 = vst [vmem:[#allocation2 + $0x178] sm:$0xff] %v1095
    %1160 = vst [vmem:[#allocation2 + $0x180] sm:$0xff] %v1096
    %1161 = vst [vmem:[#allocation2 + $0x188] sm:$0xff] %v1097
    %1162 = vst [vmem:[#allocation2 + $0x190] sm:$0xff] %v1098
    %1163 = vst [vmem:[#allocation2 + $0x198] sm:$0xff] %v1099
    %1164 = vst [vmem:[#allocation2 + $0x1a0] sm:$0xff] %v1100
    %1165 = vst [vmem:[#allocation2 + $0x1a8] sm:$0xff] %v1101
    %1166 = vst [vmem:[#allocation2 + $0x1b0] sm:$0xff] %v1102
    %1167 = vst [vmem:[#allocation2 + $0x1b8] sm:$0xff] %v1103
    %1168 = vst [vmem:[#allocation2 + $0x1c0] sm:$0xff] %v1104
    %1169 = vst [vmem:[#allocation2 + $0x1c8] sm:$0xff] %v1105
    %1170 = vst [vmem:[#allocation2 + $0x1d0] sm:$0xff] %v1106
    %1171 = vst [vmem:[#allocation2 + $0x1d8] sm:$0xff] %v1107
    %1172 = vst [vmem:[#allocation2 + $0x1e0] sm:$0xff] %v1108
    %1173 = vst [vmem:[#allocation2 + $0x1e8] sm:$0xff] %v1109
    %1174 = vst [vmem:[#allocation2 + $0x1f0] sm:$0xff] %v1110
    %1175 = vst [vmem:[#allocation2 + $0x1f8] sm:$0xff] %v1111
    // Predicated region
    $region10: #{tpu_custom_call.1} parent=1 // pred_check
      _
    $region11: #{tpu_custom_call.1} parent=1 // pred_check_branch
      %1177 = sbr.rel (0) target = $region13
    $region12: #{tpu_custom_call.1} parent=1 // pred_region
      %s1179 = ssub.s32 8192, 8192
      %1180 = vsyncadd [#allocation3], %s1179
      %s1181 = sshll.u32 [#allocation2], 4
      %s1182 = int_to_ptr.vmem [resolvable:$true] %s1181
      %1187 = dma.vmem_to_hbm [thread:$0]  %s1182, 8192, %s2, [#allocation3], 256, 256, 16
    $region13: #{tpu_custom_call.1} parent=1 // pred_fallthru
      _
    // Predicated region
    $region14: #{tpu_custom_call.1} parent=1 // pred_check
      _
    $region15: #{tpu_custom_call.1} parent=1 // pred_check_branch
      %1189 = sbr.rel (0) target = $region17
    $region16: #{tpu_custom_call.1} parent=1 // pred_region
      %1190 = dma.done [#allocation3], 8192
    $region17: #{tpu_custom_call.1} parent=1 // pred_fallthru
      _
    %1191 = vsyncpa [#allocation3], 1

</llo_original>
